<compile_context>
chip_gen: v5e
topology: v5e:2x2
jax: 0.10.0
libtpu: 0.0.40
codegen_flags: <defaults>
</compile_context>

<pallas_src>
import functools

import jax
import jax.numpy as jnp
from jax.experimental import pallas as pl
from jax.experimental.pallas import tpu as pltpu


def _border_masks(hw, H, W):
    # Batch-invariant zero-padding validity masks, built once at (1, hw) and
    # broadcast over the batch sublanes inside jnp.where.
    # NOTE: `% W` is a cheap shift/and only for power-of-two W; acceptable here.
    col = jax.lax.broadcasted_iota(jnp.int32, (1, hw), 1)   # flattened pixel idx
    w_in_row = col % W                                      # column within row
    left_ok = w_in_row >= 1            # source column j-1 exists
    right_ok = w_in_row <= W - 2       # source column j+1 exists
    top_ok = col >= W                  # source row i-1 exists
    bot_ok = col < (H - 1) * W         # source row i+1 exists
    return left_ok, right_ok, top_ok, bot_ok


def _conv3x3_general_kernel(w_ref, b_ref, x_ref, o_ref, *, H, W):
    # General 3x3 stencil (arbitrary weights).
    # w_ref: SMEM (9,) f32 row-major 3x3 weights; b_ref: SMEM (1,) f32 bias.
    # x_ref / o_ref: VMEM (bn, H*W) f32 -- images flattened row-major (lane dense).
    x = x_ref[...]
    _, hw = x.shape
    left_ok, right_ok, top_ok, bot_ok = _border_masks(hw, H, W)

    # Pre-masked horizontal neighbours, shared by all three kernel rows.
    xl = jnp.where(left_ok, pltpu.roll(x, 1, axis=1), 0.0)        # x[.., j-1]
    xr = jnp.where(right_ok, pltpu.roll(x, hw - 1, axis=1), 0.0)  # x[.., j+1]

    # Per-kernel-row horizontal weighted sums (still in the source-row frame).
    h_top = w_ref[0] * xl + w_ref[1] * x + w_ref[2] * xr
    h_mid = w_ref[3] * xl + w_ref[4] * x + w_ref[5] * xr
    h_bot = w_ref[6] * xl + w_ref[7] * x + w_ref[8] * xr

    acc = h_mid + b_ref[0]                                        # bias folded in
    acc = acc + jnp.where(top_ok, pltpu.roll(h_top, W, axis=1), 0.0)
    acc = acc + jnp.where(bot_ok, pltpu.roll(h_bot, hw - W, axis=1), 0.0)
    o_ref[...] = acc


def _conv3x3_box_kernel(w_ref, b_ref, x_ref, o_ref, *, H, W):
    # Rank-1 fast path: all 9 weights equal w_ref[0] (the Model fills 0.3), so
    # the conv is a separable box filter: (sum over 3x3 window) * w + b.
    x = x_ref[...]
    _, hw = x.shape
    left_ok, right_ok, top_ok, bot_ok = _border_masks(hw, H, W)

    h = (x
         + jnp.where(left_ok, pltpu.roll(x, 1, axis=1), 0.0)
         + jnp.where(right_ok, pltpu.roll(x, hw - 1, axis=1), 0.0))
    acc = (h
           + jnp.where(top_ok, pltpu.roll(h, W, axis=1), 0.0)
           + jnp.where(bot_ok, pltpu.roll(h, hw - W, axis=1), 0.0))
    o_ref[...] = w_ref[0] * acc + b_ref[0]


def _pick_bn(N, HW, *, vmem_budget_bytes=24 << 20):
    """Batch rows per grid step.

    VMEM-aware (~8 block-sized f32 buffers live: double-buffered in/out plus
    stencil temporaries), 8-aligned when sub-tiling the batch, and >= 4 grid
    steps for large problems so DMA pipelines and v7x's second TensorCore gets
    work.  Tiny problems stay single-step (~0.35us/step overhead dominates).
    """
    row_bytes = HW * 4
    bn_vmem = max(8, (vmem_budget_bytes // (8 * row_bytes)) // 8 * 8)
    total_bytes = N * row_bytes
    if N <= 8 or total_bytes <= (2 << 20):
        bn = N
    else:
        bn = max(8, (-(-N // 4)) // 8 * 8)     # ~ceil(N/4), 8-aligned
    bn = min(bn, bn_vmem, N)
    if bn < N:
        bn = max(8, (bn // 8) * 8)             # sub-tiles must be sublane-aligned
    # TODO(synk): for very large single images (bn*HW*4B still over VMEM even at
    # bn<=8) add a second grid axis tiling HW by whole image rows with a 1-row halo.
    return bn


def conv_flatten_forward(x_nchw, weight, bias):
    """x_nchw: (N, 1, H, W) f32. Returns (N, H*W) f32, matching Model.forward."""
    N, C, H, W = x_nchw.shape
    assert C == 1, "Model uses Conv2d(1, 1, ...)"
    HW = H * W

    # Free, metadata-only row-major flatten of the input (no HBM copy).
    x_flat = x_nchw.reshape(N, HW).astype(jnp.float32)
    w9 = weight.reshape(9).astype(jnp.float32)   # (1,1,3,3) -> (9,)
    b1 = bias.reshape(1).astype(jnp.float32)     # (1,)

    # Use the separable fast path only when the weights are concretely uniform
    # (true for the Model's 0.3 fill); traced/non-uniform weights -> general path.
    try:
        uniform = bool(jnp.all(w9 == w9[0]))
    except jax.errors.ConcretizationTypeError:
        uniform = False
    body = _conv3x3_box_kernel if uniform else _conv3x3_general_kernel
    kernel = functools.partial(body, H=H, W=W)

    bn = _pick_bn(N, HW)
    grid = (pl.cdiv(N, bn),)

    out = pl.pallas_call(
        kernel,
        out_shape=jax.ShapeDtypeStruct((N, HW), jnp.float32),
        grid=grid,
        in_specs=[
            pl.BlockSpec(memory_space=pltpu.SMEM),        # weights (9,)
            pl.BlockSpec(memory_space=pltpu.SMEM),        # bias (1,)
            pl.BlockSpec((bn, HW), lambda i: (i, 0)),     # flattened images
        ],
        out_specs=pl.BlockSpec((bn, HW), lambda i: (i, 0)),
        compiler_params=pltpu.CompilerParams(
            dimension_semantics=("parallel",),
            vmem_limit_bytes=32 << 20,
        ),
    )(w9, b1, x_flat)

    # Already in the PyTorch x.view(N, numel // N) layout: (N, H*W).
    return out


if __name__ == "__main__":
    key = jax.random.PRNGKey(0)
    N, C, H, W = 2, 1, 16, 16
    x = jax.random.normal(key, (N, C, H, W), dtype=jnp.float32)

    def torch_ref(xx, w, b):
        y = jax.lax.conv_general_dilated(
            xx, w, window_strides=(1, 1), padding="SAME",
            dimension_numbers=("NCHW", "OIHW", "NCHW"),
        ) + b.reshape(1, 1, 1, 1)
        return y.reshape(xx.shape[0], -1)

    # 1) The Model's parameters (uniform 0.3 / 0.2) -> exercises the separable path.
    weight = jnp.full((1, 1, 3, 3), 0.3, dtype=jnp.float32)
    bias = jnp.full((1,), 0.2, dtype=jnp.float32)
    y = conv_flatten_forward(x, weight, bias)
    jax.block_until_ready(y)
    assert y.shape == (N, H * W)
    assert jnp.allclose(y, torch_ref(x, weight, bias), atol=1e-5), "uniform-weight mismatch"

    # 2) Non-uniform weights -> exercises the general stencil path.
    w2 = jax.random.normal(jax.random.PRNGKey(1), (1, 1, 3, 3), dtype=jnp.float32)
    b2 = jnp.asarray([-0.1], dtype=jnp.float32)
    y2 = conv_flatten_forward(x, w2, b2)
    jax.block_until_ready(y2)
    assert jnp.allclose(y2, torch_ref(x, w2, b2), atol=1e-5), "general-weight mismatch"

    print("KERNEL_OK")
</pallas_src>

<mosaic_0001>
module attributes {stable_mosaic.version = 11 : i64} {
  func.func @_conv3x3_box_kernel(%arg0: i32, %arg1: memref<9xf32, #tpu.memory_space<smem>>, %arg2: memref<1xf32, #tpu.memory_space<smem>>, %arg3: memref<2x256xf32, #tpu.memory_space<vmem>>, %arg4: memref<2x256xf32, #tpu.memory_space<vmem>>) attributes {dimension_semantics = [#tpu.dimension_semantics<parallel>], iteration_bounds = array<i64: 1>, scalar_prefetch = 0 : i64, scratch_operands = 0 : i64, tpu.core_type = #tpu.core_type<tc>, window_params = [{transform_indices = @transform_0, window_bounds = array<i64: 9>}, {transform_indices = @transform_1, window_bounds = array<i64: 1>}, {transform_indices = @transform_2, window_bounds = array<i64: 2, 256>}, {transform_indices = @transform_3, window_bounds = array<i64: 2, 256>}]} {
    %c0 = arith.constant 0 : index
    %c0_0 = arith.constant 0 : index
    %0 = vector.load %arg3[%c0, %c0_0] : memref<2x256xf32, #tpu.memory_space<vmem>>, vector<2x256xf32>
    %1 = tpu.iota {dimensions = array<i32: 1>} : vector<1x256xi32>
    %c16_i32 = arith.constant 16 : i32
    %c0_i32 = arith.constant 0 : i32
    %2 = arith.cmpi eq, %c16_i32, %c0_i32 : i32
    %c1_i32 = arith.constant 1 : i32
    %3 = arith.select %2, %c1_i32, %c16_i32 : i32
    %4 = vector.broadcast %3 : i32 to vector<1x256xi32>
    %5 = arith.remsi %1, %4 : vector<1x256xi32>
    %c0_i32_1 = arith.constant 0 : i32
    %6 = vector.broadcast %c0_i32_1 : i32 to vector<1x256xi32>
    %7 = arith.cmpi ne, %5, %6 : vector<1x256xi32>
    %c0_i32_2 = arith.constant 0 : i32
    %8 = vector.broadcast %c0_i32_2 : i32 to vector<1x256xi32>
    %9 = arith.cmpi slt, %5, %8 : vector<1x256xi32>
    %c0_i32_3 = arith.constant 0 : i32
    %10 = arith.cmpi slt, %3, %c0_i32_3 : i32
    %11 = vector.broadcast %10 : i1 to vector<1x256xi1>
    %12 = vector.broadcast %11 : vector<1x256xi1> to vector<1x256xi1>
    %13 = arith.xori %9, %12 : vector<1x256xi1>
    %14 = arith.andi %13, %7 : vector<1x256xi1>
    %15 = vector.broadcast %3 : i32 to vector<1x256xi32>
    %16 = arith.addi %5, %15 : vector<1x256xi32>
    %17 = arith.select %14, %16, %5 : vector<1x256xi1>, vector<1x256xi32>
    %c1_i32_4 = arith.constant 1 : i32
    %18 = vector.broadcast %c1_i32_4 : i32 to vector<1x256xi32>
    %19 = arith.cmpi sge, %17, %18 : vector<1x256xi32>
    %c14_i32 = arith.constant 14 : i32
    %20 = vector.broadcast %c14_i32 : i32 to vector<1x256xi32>
    %21 = arith.cmpi sle, %17, %20 : vector<1x256xi32>
    %c16_i32_5 = arith.constant 16 : i32
    %22 = vector.broadcast %c16_i32_5 : i32 to vector<1x256xi32>
    %23 = arith.cmpi sge, %1, %22 : vector<1x256xi32>
    %c240_i32 = arith.constant 240 : i32
    %24 = vector.broadcast %c240_i32 : i32 to vector<1x256xi32>
    %25 = arith.cmpi slt, %1, %24 : vector<1x256xi32>
    %c1_i32_6 = arith.constant 1 : i32
    %26 = tpu.dynamic_rotate %0 by %c1_i32_6 dim 1 : vector<2x256xf32>, i32 -> vector<2x256xf32>
    %cst = arith.constant 0.000000e+00 : f32
    %27 = vector.shape_cast %19 : vector<1x256xi1> to vector<1x256xi1>
    %28 = vector.broadcast %27 : vector<1x256xi1> to vector<2x256xi1>
    %29 = vector.broadcast %cst : f32 to vector<2x256xf32>
    %30 = arith.select %28, %26, %29 : vector<2x256xi1>, vector<2x256xf32>
    %31 = arith.addf %0, %30 : vector<2x256xf32>
    %c255_i32 = arith.constant 255 : i32
    %32 = tpu.dynamic_rotate %0 by %c255_i32 dim 1 : vector<2x256xf32>, i32 -> vector<2x256xf32>
    %cst_7 = arith.constant 0.000000e+00 : f32
    %33 = vector.shape_cast %21 : vector<1x256xi1> to vector<1x256xi1>
    %34 = vector.broadcast %33 : vector<1x256xi1> to vector<2x256xi1>
    %35 = vector.broadcast %cst_7 : f32 to vector<2x256xf32>
    %36 = arith.select %34, %32, %35 : vector<2x256xi1>, vector<2x256xf32>
    %37 = arith.addf %31, %36 : vector<2x256xf32>
    %c16_i32_8 = arith.constant 16 : i32
    %38 = tpu.dynamic_rotate %37 by %c16_i32_8 dim 1 : vector<2x256xf32>, i32 -> vector<2x256xf32>
    %cst_9 = arith.constant 0.000000e+00 : f32
    %39 = vector.shape_cast %23 : vector<1x256xi1> to vector<1x256xi1>
    %40 = vector.broadcast %39 : vector<1x256xi1> to vector<2x256xi1>
    %41 = vector.broadcast %cst_9 : f32 to vector<2x256xf32>
    %42 = arith.select %40, %38, %41 : vector<2x256xi1>, vector<2x256xf32>
    %43 = arith.addf %37, %42 : vector<2x256xf32>
    %c240_i32_10 = arith.constant 240 : i32
    %44 = tpu.dynamic_rotate %37 by %c240_i32_10 dim 1 : vector<2x256xf32>, i32 -> vector<2x256xf32>
    %cst_11 = arith.constant 0.000000e+00 : f32
    %45 = vector.shape_cast %25 : vector<1x256xi1> to vector<1x256xi1>
    %46 = vector.broadcast %45 : vector<1x256xi1> to vector<2x256xi1>
    %47 = vector.broadcast %cst_11 : f32 to vector<2x256xf32>
    %48 = arith.select %46, %44, %47 : vector<2x256xi1>, vector<2x256xf32>
    %49 = arith.addf %43, %48 : vector<2x256xf32>
    %c0_12 = arith.constant 0 : index
    %50 = memref.load %arg1[%c0_12] : memref<9xf32, #tpu.memory_space<smem>>
    %51 = vector.broadcast %50 : f32 to vector<2x256xf32>
    %52 = arith.mulf %51, %49 : vector<2x256xf32>
    %c0_13 = arith.constant 0 : index
    %53 = memref.load %arg2[%c0_13] : memref<1xf32, #tpu.memory_space<smem>>
    %54 = vector.broadcast %53 : f32 to vector<2x256xf32>
    %55 = arith.addf %52, %54 : vector<2x256xf32>
    %c0_14 = arith.constant 0 : index
    %c0_15 = arith.constant 0 : index
    %56 = vector.load %arg4[%c0_14, %c0_15] : memref<2x256xf32, #tpu.memory_space<vmem>>, vector<2x256xf32>
    tpu.vector_store %arg4[%c0_14, %c0_15], %55 {strides = array<i32>} : memref<2x256xf32, #tpu.memory_space<vmem>>, vector<2x256xf32>,
    return
  }
  func.func @transform_0(%arg0: i32) -> i32 {
    %c0_i32 = arith.constant 0 : i32
    %c0_i32_0 = arith.constant 0 : i32
    return %c0_i32 : i32
  }
  func.func @transform_1(%arg0: i32) -> i32 {
    %c0_i32 = arith.constant 0 : i32
    %c0_i32_0 = arith.constant 0 : i32
    return %c0_i32 : i32
  }
  func.func @transform_2(%arg0: i32) -> (i32, i32) {
    %c0_i32 = arith.constant 0 : i32
    %c0_i32_0 = arith.constant 0 : i32
    return %arg0, %c0_i32 : i32, i32
  }
  func.func @transform_3(%arg0: i32) -> (i32, i32) {
    %c0_i32 = arith.constant 0 : i32
    %c0_i32_0 = arith.constant 0 : i32
    return %arg0, %c0_i32 : i32, i32
  }
}

</mosaic_0001>

<llo_original>
// kernel: tpu_custom_call.1
$region0: #{tpu_custom_call.1}
  #allocation0 [shape = 'u32[]', space=smem, size = 0x4, offset = 0x4, fixed_abs, tag = 'smem constant byte address 0x4 - core index']
  #allocation1 [shape = 'u32[72,128]{1,0:T(1,128)}', space=vmem, size = 0x9000, scoped, tag = 'internal scratch']
  #allocation2 [shape = 'f32[1]{0:T(128)S(6)}', space=smem, size = 0x200, scoped, tag = 'scoped memory for tpu_custom_call.1']
  %s0 = inlined_call_operand.vmem [shape: f32[9], index: 0, kind: input, shape index: {}]
  %s1 = inlined_call_operand.<no memory space> [shape: f32[1], index: 1, kind: input, shape index: {}]
  %s2 = inlined_call_operand.hbm [shape: f32[2,256], index: 2, kind: input, shape index: {}]
  %s3 = inlined_call_operand.hbm [shape: f32[2,256], index: 3, kind: output, shape index: {}]
  %s4 = sld [smem:[#allocation0]]
  $region30: #{tpu_custom_call.1} parent=0
    _
  %s6 = ssub.s32 1, %s4
  %s7 = scalar_select 0, %s6, %s4
  %8 = sst [smem:[#allocation2]] %s1
  $region1: #{tpu_custom_call.1} parent=0
    #allocation3 [shape = 'u8[512]{0}', space=smem, size = 0x200, scoped, tag = 'input window, operand 0, single buffered']
    #allocation4 [shape = 's32[1]{0}', space=sflag, size = 0x4, scoped, tag = 'scoped memory for tpu_custom_call.1']
    #allocation5 [shape = 's32[1]{0}', space=sflag, size = 0x4, scoped, tag = 'scoped memory for tpu_custom_call.1']
    #allocation6 [shape = 's32[1]{0}', space=sflag, size = 0x4, scoped, tag = 'scoped memory for tpu_custom_call.1']
    #allocation7 [shape = 'u8[2048]{0}', space=vmem, size = 0x800, scoped, tag = 'input window, operand 2, single buffered']
    #allocation8 [shape = 'u8[2048]{0}', space=vmem, size = 0x800, scoped, tag = 'output window, operand 0, single buffered']
    %9 = vsyncpa [#allocation6], 0
    %10 = vsyncpa [#allocation4], 0
    %11 = vsyncpa [#allocation5], 0
    // Predicated region
    $region2: #{tpu_custom_call.1} parent=1 // pred_check
      _
    $region3: #{tpu_custom_call.1} parent=1 // pred_check_branch
      %13 = sbr.rel (0) target = $region5
    $region4: #{tpu_custom_call.1} parent=1 // pred_region
      %15 = vsyncadd [#allocation6], 0
      %s17 = sshll.u32 %s0, 4
      %s18 = int_to_ptr.vmem [resolvable:$true] %s17
      %20 = dma.vmem_to_smem %s18, 16, [#allocation3], [#allocation6]
    $region5: #{tpu_custom_call.1} parent=1 // pred_fallthru
      _
    // Predicated region
    $region6: #{tpu_custom_call.1} parent=1 // pred_check
      _
    $region7: #{tpu_custom_call.1} parent=1 // pred_check_branch
      %22 = sbr.rel (0) target = $region9
    $region8: #{tpu_custom_call.1} parent=1 // pred_region
      _
    $region9: #{tpu_custom_call.1} parent=1 // pred_fallthru
      _
    // Predicated region
    $region10: #{tpu_custom_call.1} parent=1 // pred_check
      _
    $region11: #{tpu_custom_call.1} parent=1 // pred_check_branch
      %24 = sbr.rel (0) target = $region13
    $region12: #{tpu_custom_call.1} parent=1 // pred_region
      %26 = vsyncadd [#allocation4], 0
      %s28 = sshll.u32 %s2, 4
      %s29 = int_to_ptr.hbm [resolvable:$true] %s28
      %s30 = sshll.u32 [#allocation7], 4
      %s31 = int_to_ptr.vmem [resolvable:$true] %s30
      %33 = dma.hbm_to_vmem [thread:$0]  %s29, 64, %s31, [#allocation4]
    $region13: #{tpu_custom_call.1} parent=1 // pred_fallthru
      _
    // Predicated region
    $region14: #{tpu_custom_call.1} parent=1 // pred_check
      _
    $region15: #{tpu_custom_call.1} parent=1 // pred_check_branch
      %35 = sbr.rel (0) target = $region17
    $region16: #{tpu_custom_call.1} parent=1 // pred_region
      %37 = dma.done [#allocation6], 16
    $region17: #{tpu_custom_call.1} parent=1 // pred_fallthru
      _
    // Predicated region
    $region18: #{tpu_custom_call.1} parent=1 // pred_check
      _
    $region19: #{tpu_custom_call.1} parent=1 // pred_check_branch
      %39 = sbr.rel (0) target = $region21
    $region20: #{tpu_custom_call.1} parent=1 // pred_region
      %41 = dma.done [#allocation4], 64
    $region21: #{tpu_custom_call.1} parent=1 // pred_fallthru
      _
    %42 = sfence
    %v43 = vld [vmem:[#allocation7] sm:$0xf]
    %v44 = vlaneseq
    %v45 = vand.u32 %v44, 127
    %v46 = vadd.s32 %v45, 128
    %vm47 = vcmp.lt.s32.totalorder %v45, 0
    %v48 = vsub.s32 0, %v45
    %v49 = vsel %vm47, %v48, %v45
    %v50 = vshrl.u32 %v49, 4
    %v51 = vand.u32 %v49, 15
    %v52 = vsub.s32 0, %v51
    %v53 = vsel %vm47, %v52, %v51
    %vm54 = vcmp.lt.s32.totalorder %v46, 0
    %v55 = vsub.s32 0, %v46
    %v56 = vsel %vm54, %v55, %v46
    %v57 = vshrl.u32 %v56, 4
    %v58 = vand.u32 %v56, 15
    %v59 = vsub.s32 0, %v58
    %v60 = vsel %vm54, %v59, %v58
    %vm61 = vcmp.ne.s32.totalorder %v53, 0
    %vm62 = vcmp.ne.s32.totalorder %v60, 0
    %vm63 = vcmp.lt.s32.totalorder %v53, 0
    %vm64 = vcmp.lt.s32.totalorder %v60, 0
    %vm65 = vmand %vm63, %vm61
    %vm66 = vmand %vm64, %vm62
    %v67 = vadd.s32 %v53, 16
    %v68 = vadd.s32 %v60, 16
    %v69 = vsel %vm65, %v67, %v53
    %v70 = vsel %vm66, %v68, %v60
    %vm71 = vcmp.ge.s32.totalorder %v69, 1
    %vm72 = vcmp.ge.s32.totalorder %v70, 1
    %vm73 = vcmp.le.s32.totalorder %v69, 14
    %vm74 = vcmp.le.s32.totalorder %v70, 14
    %vm75 = vcmp.ge.s32.totalorder %v45, 16
    %vm76 = vcmp.ge.s32.totalorder %v46, 16
    %vm77 = vcmp.lt.s32.totalorder %v45, 240
    %vm78 = vcmp.lt.s32.totalorder %v46, 240
    %80 = vst [vmem:[#allocation1] ss:$4 sm:$0xff] %v43
    %v81 = vld.sshfl [vmem:[#allocation1] sm:$0xff pattern:$0x73625140]
    %v82 = vld.sshfl [vmem:[#allocation1 + $0x8] sm:$0xff pattern:$0x73625140]
    %85 = vrot.lane.b32.xlu0 %v81, 1
    %v86 = vpop.permute.xlu0 %85
    %87 = vrot.lane.b32.xlu0 %v82, 1
    %v88 = vpop.permute.xlu0 %87
    %vm89 = vcmp.lt.s32.totalorder %v45, 1
    %v90 = vsel %vm89, %v86, %v88
    %v91 = vsel %vm89, %v88, %v86
    %v92 = vsel %vm71, 1, 0
    %v93 = vsel %vm72, 1, 0
    %vm94 = vcmp.eq.s32.totalorder %v92, 1
    %vm95 = vcmp.eq.s32.totalorder %v93, 1
    %v96 = vsel %vm94, %v91, 0.0
    %v97 = vsel %vm95, %v90, 0.0
    %v100 = vrot.slane %v97, 6
    %vm101 = vcmask 1041408
    %v102 = vsel %vm101, %v96, %v100
    %v104 = vadd.f32 %v43, %v102
    %105 = vst [vmem:[#allocation1] ss:$4 sm:$0xff] %v43
    %v106 = vld.sshfl [vmem:[#allocation1] sm:$0xff pattern:$0x73625140]
    %v107 = vld.sshfl [vmem:[#allocation1 + $0x8] sm:$0xff pattern:$0x73625140]
    %110 = vrot.lane.b32.xlu0 %v106, 127
    %v111 = vpop.permute.xlu0 %110
    %112 = vrot.lane.b32.xlu0 %v107, 127
    %v113 = vpop.permute.xlu0 %112
    %vm114 = vcmp.lt.s32.totalorder %v45, 127
    %v115 = vsel %vm114, %v111, %v113
    %v116 = vsel %vm114, %v113, %v111
    %v117 = vsel %vm73, 1, 0
    %v118 = vsel %vm74, 1, 0
    %vm119 = vcmp.eq.s32.totalorder %v117, 1
    %vm120 = vcmp.eq.s32.totalorder %v118, 1
    %v121 = vsel %vm119, %v115, 0.0
    %v122 = vsel %vm120, %v116, 0.0
    %v125 = vrot.slane %v122, 6
    %v126 = vsel %vm101, %v121, %v125
    %v128 = vadd.f32 %v104, %v126
    %130 = vst [vmem:[#allocation1] ss:$4 sm:$0xff] %v128
    %v131 = vld.sshfl [vmem:[#allocation1] sm:$0xff pattern:$0x73625140]
    %v132 = vld.sshfl [vmem:[#allocation1 + $0x8] sm:$0xff pattern:$0x73625140]
    %135 = vrot.lane.b32.xlu0 %v131, 16
    %v136 = vpop.permute.xlu0 %135
    %137 = vrot.lane.b32.xlu0 %v132, 16
    %v138 = vpop.permute.xlu0 %137
    %vm139 = vcmp.lt.s32.totalorder %v45, 16
    %v140 = vsel %vm139, %v136, %v138
    %v141 = vsel %vm139, %v138, %v136
    %v142 = vsel %vm75, 1, 0
    %v143 = vsel %vm76, 1, 0
    %vm144 = vcmp.eq.s32.totalorder %v142, 1
    %vm145 = vcmp.eq.s32.totalorder %v143, 1
    %v146 = vsel %vm144, %v141, 0.0
    %v147 = vsel %vm145, %v140, 0.0
    %v150 = vrot.slane %v147, 6
    %v151 = vsel %vm101, %v146, %v150
    %v153 = vadd.f32 %v128, %v151
    %154 = vst [vmem:[#allocation1] ss:$4 sm:$0xff] %v128
    %v155 = vld.sshfl [vmem:[#allocation1] sm:$0xff pattern:$0x73625140]
    %v156 = vld.sshfl [vmem:[#allocation1 + $0x8] sm:$0xff pattern:$0x73625140]
    %159 = vrot.lane.b32.xlu0 %v155, 112
    %v160 = vpop.permute.xlu0 %159
    %161 = vrot.lane.b32.xlu0 %v156, 112
    %v162 = vpop.permute.xlu0 %161
    %vm163 = vcmp.lt.s32.totalorder %v45, 112
    %v164 = vsel %vm163, %v160, %v162
    %v165 = vsel %vm163, %v162, %v160
    %v166 = vsel %vm77, 1, 0
    %v167 = vsel %vm78, 1, 0
    %vm168 = vcmp.eq.s32.totalorder %v166, 1
    %vm169 = vcmp.eq.s32.totalorder %v167, 1
    %v170 = vsel %vm168, %v164, 0.0
    %v171 = vsel %vm169, %v165, 0.0
    %v174 = vrot.slane %v171, 6
    %v175 = vsel %vm101, %v170, %v174
    %v177 = vadd.f32 %v153, %v175
    %s178 = sld [smem:[#allocation3]]
    %v179 = vstv %s178
    %v180 = vmul.f32 %v179, %v177
    %s181 = sld [smem:[#allocation2]]
    %v182 = vstv %s181
    %v183 = vadd.f32 %v180, %v182
    %184 = vst [vmem:[#allocation8] sm:$0xf] %v183
    // Predicated region
    $region22: #{tpu_custom_call.1} parent=1 // pred_check
      _
    $region23: #{tpu_custom_call.1} parent=1 // pred_check_branch
      %186 = sbr.rel (0) target = $region25
    $region24: #{tpu_custom_call.1} parent=1 // pred_region
      %188 = vsyncadd [#allocation5], 0
      %s190 = sshll.u32 [#allocation8], 4
      %s191 = int_to_ptr.vmem [resolvable:$true] %s190
      %s192 = sshll.u32 %s3, 4
      %s193 = int_to_ptr.hbm [resolvable:$true] %s192
      %195 = dma.vmem_to_hbm [thread:$0]  %s191, 64, %s193, [#allocation5]
    $region25: #{tpu_custom_call.1} parent=1 // pred_fallthru
      _
    // Predicated region
    $region26: #{tpu_custom_call.1} parent=1 // pred_check
      _
    $region27: #{tpu_custom_call.1} parent=1 // pred_check_branch
      %197 = sbr.rel (0) target = $region29
    $region28: #{tpu_custom_call.1} parent=1 // pred_region
      %199 = dma.done [#allocation5], 64
    $region29: #{tpu_custom_call.1} parent=1 // pred_fallthru
      _
    %200 = vsyncpa [#allocation4], 1
    %201 = vsyncpa [#allocation5], 1
    %202 = vsyncpa [#allocation6], 1

</llo_original>
